<compile_context>
chip_gen: v7x
topology: tpu7x:2x2x1
jax: 0.10.0
libtpu: 0.0.40
codegen_flags: <defaults>
</compile_context>

<pallas_src>
import functools

import jax
import jax.numpy as jnp
from jax import lax
from jax.experimental import pallas as pl
from jax.experimental.pallas import tpu as pltpu


# ---------------------------------------------------------------------------
# Kernel 1: relation max pools (row pool over key_len, col pool over query_len)
# ---------------------------------------------------------------------------
def _relation_pool_kernel(rel_ref, row_ref, col_ref):
    kt = pl.program_id(1)
    rel = rel_ref[0]                           # (Q, TK, E)

    # Column pool: max over the query dim for this K tile (each tile written once).
    col_ref[0] = jnp.max(rel, axis=0)          # (TK, E)

    # Row pool: running max over K tiles (output block resident across kt).
    tile_row = jnp.max(rel, axis=1)            # (Q, E)

    @pl.when(kt == 0)
    def _():
        row_ref[0] = tile_row

    @pl.when(kt != 0)
    def _():
        row_ref[0] = jnp.maximum(row_ref[0], tile_row)


def _choose_k_tile(q_len, k_len, embed, itemsize, budget_bytes=4 * 1024 * 1024):
    """Full K if it fits the budget, else the largest multiple-of-8 divisor."""
    if q_len * k_len * embed * itemsize <= budget_bytes:
        return k_len
    best = None
    for tk in range(8, k_len, 8):
        if k_len % tk == 0 and q_len * tk * embed * itemsize <= budget_bytes:
            best = tk
    return best if best is not None else k_len


def relation_max_pools(relation):
    """relation: (N, Q, K, E) -> (row_pool (N, Q, E), col_pool (N, K, E))."""
    N, Q, K, E = relation.shape
    tk = _choose_k_tile(Q, K, E, relation.dtype.itemsize)
    row, col = pl.pallas_call(
        _relation_pool_kernel,
        out_shape=(jax.ShapeDtypeStruct((N, Q, E), relation.dtype),
                   jax.ShapeDtypeStruct((N, K, E), relation.dtype)),
        grid=(N, K // tk),
        in_specs=[pl.BlockSpec((1, Q, tk, E), lambda n, k: (n, 0, k, 0))],
        out_specs=(pl.BlockSpec((1, Q, E), lambda n, k: (n, 0, 0)),
                   pl.BlockSpec((1, tk, E), lambda n, k: (n, k, 0))),
        compiler_params=pltpu.CompilerParams(
            dimension_semantics=("parallel", "arbitrary"),
            vmem_limit_bytes=32 * 1024 * 1024),
    )(relation)
    return row, col


# ---------------------------------------------------------------------------
# Kernel 2: projections + relation add + attention + fc_out, one batch per step
# ---------------------------------------------------------------------------
def _attn_kernel(v_ref, k_ref, q_ref, mask_ref, rrow_ref, rcol_ref,
                 wv_ref, wk_ref, wq_ref, woT_ref, bo_ref, o_ref,
                 *, heads, inv_scale):
    v2 = v_ref[0]                       # (Sv, E)  (Sv == Sq in this module)
    k2 = k_ref[0]                       # (Sk, E)
    q2 = q_ref[0]                       # (Sq, E)
    masked = mask_ref[0, 0] == 1        # (Sq, Sk); broadcast over heads in-kernel

    # Lane-dense projections: x @ block_diag(W.T) == per-head x(S,H,D) @ W.T.
    vv = jnp.dot(v2, wv_ref[...], preferred_element_type=jnp.float32)   # (Sv, E)
    kk = jnp.dot(k2, wk_ref[...], preferred_element_type=jnp.float32)   # (Sk, E)
    qq = jnp.dot(q2, wq_ref[...], preferred_element_type=jnp.float32)   # (Sq, E)

    # Relation add; fold 1/sqrt(embed_size) into the query side (O(S*E) mul
    # instead of an O(S*S) divide on the energy).
    qr = (qq + rrow_ref[0]) * jnp.float32(inv_scale)                    # (Sq, E)
    kr = kk + rcol_ref[0]                                               # (Sk, E)

    E = qq.shape[-1]
    D = E // heads

    outs = []
    for h in range(heads):              # static unroll; heads is small
        qr_h = qr[:, h * D:(h + 1) * D]                                 # (Sq, D)
        kr_h = kr[:, h * D:(h + 1) * D]                                 # (Sk, D)
        # QK^T: contract last dims of both operands (no in-kernel transpose).
        energy = lax.dot_general(qr_h, kr_h, (((1,), (1,)), ((), ())),
                                 preferred_element_type=jnp.float32)    # (Sq, Sk)
        energy = jnp.where(masked, jnp.float32(-1e20), energy)
        m = jnp.max(energy, axis=-1, keepdims=True)
        e = jnp.exp(energy - m)
        s = jnp.sum(e, axis=-1, keepdims=True)
        # Faithful to torch.einsum('nhqk,nqhd->nqhd', attn, values): attention
        # is summed over k, i.e. sum_k softmax == s * (1/s).
        attn_sum = s * pl.reciprocal(s, approx=True)                    # (Sq, 1)
        outs.append(vv[:, h * D:(h + 1) * D] * attn_sum)                # (Sq, D)

    out2 = jnp.concatenate(outs, axis=1)                                # (Sq, E)
    # Single fused fc_out matmul: contraction dim E (MXU-friendly); weight is
    # pre-transposed on the host.
    y = jnp.dot(out2, woT_ref[...], preferred_element_type=jnp.float32)
    o_ref[0] = (y + bo_ref[...]).astype(o_ref.dtype)


def relation_mhsa(values, keys, query, mask, relation, params, heads):
    """values/keys/query: (N, S, E); relation: (N, Sq, Sk, E);
    mask broadcastable to (N, 1, Sq, Sk); params = (wv, wk, wq, wo, bo) in
    torch Linear convention (weight shape = (out, in))."""
    wv, wk, wq, wo, bo = params
    N, Sq, E = query.shape
    Sk = keys.shape[1]
    Sv = values.shape[1]
    D = E // heads
    assert D * heads == E

    # ---- host-side layout plumbing (no hot-path compute hoisted) ----
    eye_h = jnp.eye(heads, dtype=wv.dtype)
    wv_bd = jnp.kron(eye_h, wv.T)     # (E, E) block-diag of W.T
    wk_bd = jnp.kron(eye_h, wk.T)
    wq_bd = jnp.kron(eye_h, wq.T)
    woT = wo.T
    bo2 = bo.reshape(1, E)
    # Single head slice of the mask; broadcast over heads inside the kernel.
    # TODO(synk): a genuinely per-head mask (N, heads, Sq, Sk) would need the head dim kept.
    mask1 = jnp.broadcast_to(mask, (N, 1, Sq, Sk)).astype(jnp.int32)

    # ---- kernel 1: relation pools (keeps O(S^2*E) tensor out of kernel 2) ----
    rel_row, rel_col = relation_max_pools(relation)      # (N,Sq,E), (N,Sk,E)

    inv_scale = 1.0 / (float(E) ** 0.5)
    kernel = functools.partial(_attn_kernel, heads=heads, inv_scale=inv_scale)

    out = pl.pallas_call(
        kernel,
        out_shape=jax.ShapeDtypeStruct((N, Sq, E), query.dtype),
        grid=(N,),
        in_specs=[
            pl.BlockSpec((1, Sv, E), lambda n: (n, 0, 0)),           # values
            pl.BlockSpec((1, Sk, E), lambda n: (n, 0, 0)),           # keys
            pl.BlockSpec((1, Sq, E), lambda n: (n, 0, 0)),           # query
            pl.BlockSpec((1, 1, Sq, Sk), lambda n: (n, 0, 0, 0)),    # mask (1 head)
            pl.BlockSpec((1, Sq, E), lambda n: (n, 0, 0)),           # relation row pool
            pl.BlockSpec((1, Sk, E), lambda n: (n, 0, 0)),           # relation col pool
            pl.BlockSpec((E, E), lambda n: (0, 0)),                  # Wv block-diag
            pl.BlockSpec((E, E), lambda n: (0, 0)),                  # Wk block-diag
            pl.BlockSpec((E, E), lambda n: (0, 0)),                  # Wq block-diag
            pl.BlockSpec((E, E), lambda n: (0, 0)),                  # Wo^T
            pl.BlockSpec((1, E), lambda n: (0, 0)),                  # fc_out bias
        ],
        out_specs=pl.BlockSpec((1, Sq, E), lambda n: (n, 0, 0)),
        compiler_params=pltpu.CompilerParams(
            dimension_semantics=("parallel",),        # batch axis -> both v7x TCs
            vmem_limit_bytes=32 * 1024 * 1024),
    )(values, keys, query, mask1, rel_row, rel_col,
      wv_bd, wk_bd, wq_bd, woT, bo2)
    return out


def relation_mhsa_reference(values, keys, query, mask, relation, params, heads):
    """Pure-JAX transcription of the PyTorch forward (correctness oracle)."""
    wv, wk, wq, wo, bo = params
    N, S, E = query.shape
    D = E // heads
    v = values.reshape(N, -1, heads, D)
    k = keys.reshape(N, -1, heads, D)
    q = query.reshape(N, S, heads, D)
    rel = relation.reshape(N, S, k.shape[1], heads, D)
    rel_row = jnp.max(rel, axis=2)           # max over key_len   (dim=-3)
    rel_col = jnp.max(rel, axis=1)           # max over query_len (dim=-4)
    v = jnp.einsum('nvhd,od->nvho', v, wv)
    k = jnp.einsum('nkhd,od->nkho', k, wk)
    q = jnp.einsum('nqhd,od->nqho', q, wq)
    qr = q + rel_row
    kr = k + rel_col
    energy = jnp.einsum('nqhd,nkhd->nhqk', qr, kr)
    energy = jnp.where(mask == 1, jnp.float32(-1e20), energy)
    attn = jax.nn.softmax(energy / (E ** 0.5), axis=3)
    out = jnp.einsum('nhqk,nqhd->nqhd', attn, v).reshape(N, S, heads * D)
    return out @ wo.T + bo


if __name__ == "__main__":
    # Small, module-consistent shapes.
    N, seq, heads, head_dim = 2, 8, 4, 8
    embed = heads * head_dim  # 32

    key = jax.random.PRNGKey(0)
    ks = jax.random.split(key, 10)

    values = jax.random.normal(ks[0], (N, seq, embed), jnp.float32)
    keys_in = jax.random.normal(ks[1], (N, seq, embed), jnp.float32)
    query = jax.random.normal(ks[2], (N, seq, embed), jnp.float32)
    relation = jax.random.normal(ks[3], (N, seq, seq, embed), jnp.float32)
    mask = (jax.random.uniform(ks[4], (N, 1, seq, seq)) < 0.2).astype(jnp.int32)

    # Deterministic synthetic parameters (torch Linear convention: weight is (out, in)).
    wv = jax.random.normal(ks[5], (head_dim, head_dim), jnp.float32) * 0.1
    wk = jax.random.normal(ks[6], (head_dim, head_dim), jnp.float32) * 0.1
    wq = jax.random.normal(ks[7], (head_dim, head_dim), jnp.float32) * 0.1
    wo = jax.random.normal(ks[8], (embed, embed), jnp.float32) * 0.1
    bo = jax.random.normal(ks[9], (embed,), jnp.float32) * 0.1
    params = (wv, wk, wq, wo, bo)
    # TODO(synk): self.relations Linear is defined in __init__ but unused in forward; omitted.

    out = relation_mhsa(values, keys_in, query, mask, relation, params, heads)
    out = jax.block_until_ready(out)

    ref = relation_mhsa_reference(values, keys_in, query, mask, relation, params, heads)
    ref = jax.block_until_ready(ref)

    max_diff = float(jnp.max(jnp.abs(out - ref)))
    if not bool(jnp.allclose(out, ref, rtol=2e-2, atol=2e-2)):
        raise RuntimeError(f"kernel/reference mismatch, max abs diff = {max_diff}")

    print("KERNEL_OK")
</pallas_src>

<mosaic_0001>
module attributes {stable_mosaic.version = 11 : i64} {
  func.func @_relation_pool_kernel(%arg0: i32, %arg1: i32, %arg2: memref<1x8x8x32xf32, #tpu.memory_space<vmem>>, %arg3: memref<1x8x32xf32, #tpu.memory_space<vmem>>, %arg4: memref<1x8x32xf32, #tpu.memory_space<vmem>>) attributes {dimension_semantics = [#tpu.dimension_semantics<parallel>, #tpu.dimension_semantics<arbitrary>], iteration_bounds = array<i64: 2, 1>, scalar_prefetch = 0 : i64, scratch_operands = 0 : i64, tpu.core_type = #tpu.core_type<tc>, window_params = [{transform_indices = @transform_0, window_bounds = array<i64: 1, 8, 8, 32>}, {transform_indices = @transform_1, window_bounds = array<i64: 1, 8, 32>}, {transform_indices = @transform_2, window_bounds = array<i64: 1, 8, 32>}]} {
    %c0 = arith.constant 0 : index
    %c0_0 = arith.constant 0 : index
    %c0_1 = arith.constant 0 : index
    %c0_2 = arith.constant 0 : index
    %0 = vector.load %arg2[%c0, %c0_0, %c0_1, %c0_2] : memref<1x8x8x32xf32, #tpu.memory_space<vmem>>, vector<1x8x8x32xf32>
    %1 = vector.shape_cast %0 : vector<1x8x8x32xf32> to vector<8x8x32xf32>
    %cst = arith.constant dense<0xFF800000> : vector<8x32xf32>
    %2 = vector.multi_reduction <maximumf>, %1, %cst [0] : vector<8x8x32xf32> to vector<8x32xf32>
    %c0_3 = arith.constant 0 : index
    %c0_4 = arith.constant 0 : index
    %c0_5 = arith.constant 0 : index
    %3 = vector.load %arg4[%c0_3, %c0_4, %c0_5] : memref<1x8x32xf32, #tpu.memory_space<vmem>>, vector<1x8x32xf32>
    %4 = vector.shape_cast %3 : vector<1x8x32xf32> to vector<8x32xf32>
    %5 = vector.shape_cast %2 : vector<8x32xf32> to vector<1x8x32xf32>
    tpu.vector_store %arg4[%c0_3, %c0_4, %c0_5], %5 {strides = array<i32>} : memref<1x8x32xf32, #tpu.memory_space<vmem>>, vector<1x8x32xf32>,
    %cst_6 = arith.constant dense<0xFF800000> : vector<8x32xf32>
    %6 = vector.multi_reduction <maximumf>, %1, %cst_6 [1] : vector<8x8x32xf32> to vector<8x32xf32>
    %c0_i32 = arith.constant 0 : i32
    %7 = arith.cmpi eq, %arg1, %c0_i32 : i32
    %8 = arith.extui %7 : i1 to i32
    %c0_i32_7 = arith.constant 0 : i32
    %9 = arith.cmpi ne, %8, %c0_i32_7 : i32
    scf.if %9 {
      %c0_10 = arith.constant 0 : index
      %c0_11 = arith.constant 0 : index
      %c0_12 = arith.constant 0 : index
      %13 = vector.load %arg3[%c0_10, %c0_11, %c0_12] : memref<1x8x32xf32, #tpu.memory_space<vmem>>, vector<1x8x32xf32>
      %14 = vector.shape_cast %13 : vector<1x8x32xf32> to vector<8x32xf32>
      %15 = vector.shape_cast %6 : vector<8x32xf32> to vector<1x8x32xf32>
      tpu.vector_store %arg3[%c0_10, %c0_11, %c0_12], %15 {strides = array<i32>} : memref<1x8x32xf32, #tpu.memory_space<vmem>>, vector<1x8x32xf32>,
    } else {
    }
    %c0_i32_8 = arith.constant 0 : i32
    %10 = arith.cmpi ne, %arg1, %c0_i32_8 : i32
    %11 = arith.extui %10 : i1 to i32
    %c0_i32_9 = arith.constant 0 : i32
    %12 = arith.cmpi ne, %11, %c0_i32_9 : i32
    scf.if %12 {
      %c0_10 = arith.constant 0 : index
      %c0_11 = arith.constant 0 : index
      %c0_12 = arith.constant 0 : index
      %13 = vector.load %arg3[%c0_10, %c0_11, %c0_12] : memref<1x8x32xf32, #tpu.memory_space<vmem>>, vector<1x8x32xf32>
      %14 = vector.shape_cast %13 : vector<1x8x32xf32> to vector<8x32xf32>
      %15 = arith.maximumf %14, %6 : vector<8x32xf32>
      %c0_13 = arith.constant 0 : index
      %c0_14 = arith.constant 0 : index
      %c0_15 = arith.constant 0 : index
      %16 = vector.load %arg3[%c0_13, %c0_14, %c0_15] : memref<1x8x32xf32, #tpu.memory_space<vmem>>, vector<1x8x32xf32>
      %17 = vector.shape_cast %16 : vector<1x8x32xf32> to vector<8x32xf32>
      %18 = vector.shape_cast %15 : vector<8x32xf32> to vector<1x8x32xf32>
      tpu.vector_store %arg3[%c0_13, %c0_14, %c0_15], %18 {strides = array<i32>} : memref<1x8x32xf32, #tpu.memory_space<vmem>>, vector<1x8x32xf32>,
    } else {
    }
    return
  }
  func.func @transform_0(%arg0: i32, %arg1: i32) -> (i32, i32, i32, i32) {
    %c0_i32 = arith.constant 0 : i32
    %c0_i32_0 = arith.constant 0 : i32
    %c0_i32_1 = arith.constant 0 : i32
    return %arg0, %c0_i32, %arg1, %c0_i32_0 : i32, i32, i32, i32
  }
  func.func @transform_1(%arg0: i32, %arg1: i32) -> (i32, i32, i32) {
    %c0_i32 = arith.constant 0 : i32
    %c0_i32_0 = arith.constant 0 : i32
    %c0_i32_1 = arith.constant 0 : i32
    return %arg0, %c0_i32, %c0_i32_0 : i32, i32, i32
  }
  func.func @transform_2(%arg0: i32, %arg1: i32) -> (i32, i32, i32) {
    %c0_i32 = arith.constant 0 : i32
    %c0_i32_0 = arith.constant 0 : i32
    return %arg0, %arg1, %c0_i32 : i32, i32, i32
  }
}

</mosaic_0001>

<llo_original>
// kernel: tpu_custom_call.1
$region0: #{tpu_custom_call.1}
  #allocation0 [shape = 'u32[]', space=smem, size = 0x4, offset = 0x4, fixed_abs, tag = 'smem constant byte address 0x4 - core index']
  #allocation1 [shape = 'u32[144,128]{1,0:T(1,128)}', space=vmem, size = 0x12000, scoped, tag = 'internal scratch']
  %s0 = inlined_call_operand.hbm [shape: f32[2,8,8,32], index: 0, kind: input, shape index: {}]
  %s1 = inlined_call_operand.hbm [shape: f32[2,8,32], index: 1, kind: output, shape index: {0}]
  %s2 = inlined_call_operand.hbm [shape: f32[2,8,32], index: 2, kind: output, shape index: {1}]
  %3 = xla_tuple %s1, %s2
  %s4 = sld [smem:[#allocation0]]
  $region57: #{tpu_custom_call.1} parent=0
    _
  %s6 = ssub.s32 1, %s4
  %s7 = scalar_select 0, %s6, %s4
  $region1: #{tpu_custom_call.1} parent=0
    #allocation2 [shape = 'u8[65536]{0}', space=vmem, size = 0x10000, scoped, tag = 'input window, operand 0']
    #allocation3 [shape = 's32[2]{0}', space=sflag, size = 0x8, scoped, tag = 'scoped memory for tpu_custom_call.1']
    #allocation4 [shape = 's32[2]{0}', space=sflag, size = 0x8, scoped, tag = 'scoped memory for tpu_custom_call.1']
    #allocation5 [shape = 'u8[8192]{0}', space=vmem, size = 0x2000, scoped, tag = 'output window, operand 0']
    #allocation6 [shape = 'u8[8192]{0}', space=vmem, size = 0x2000, scoped, tag = 'output window, operand 1']
    #allocation7 [shape = 's32[2]{0}', space=sflag, size = 0x8, scoped, tag = 'scoped memory for tpu_custom_call.1']
    %8 = vsyncpa [#allocation3], 0
    %s9 = scalar_lea.sflag [#allocation3], 1
    %10 = vsyncpa %s9, 0
    %11 = vsyncpa [#allocation4], 0
    %s12 = scalar_lea.sflag [#allocation4], 1
    %13 = vsyncpa %s12, 0
    %14 = vsyncpa [#allocation7], 0
    %s15 = scalar_lea.sflag [#allocation7], 1
    %16 = vsyncpa %s15, 0
    loop: start=0, step=1, limit=4
    $region2: #{tpu_custom_call.1} parent=1 // loop_pre_header
      _
    $region3: #{tpu_custom_call.1} parent=1 // loop_header
      %s18 = sphi 0, %s22
      %p19 = scmp.ge.s32.totalorder %s18, 4
      %s25 = sphi 0, %s37
      %s26 = sphi 0, %s33
      %s27 = sphi 0, %s25
      %s28 = sphi 0, %s26
      %s29 = sphi 0, %s27
      %s30 = sphi 0, %s28
      %s42 = sphi 0, %s44
      %s45 = sphi 0, %s42
      %s46 = sphi 0, %s45
      %s62 = sphi 0, %s46
      %s68 = sphi 0, %s70
      %s71 = sphi 0, %s68
      %s72 = sphi 0, %s71
      %s88 = sphi 0, %s72
      %s96 = sphi 0, %s98
      %s99 = sphi 0, %s96
      %s100 = sphi 0, %s99
      %s116 = sphi 0, %s100
    $region4: #{tpu_custom_call.1} parent=1 // loop_header_branch
      %21 = sbr.rel (%p19) target = $region8
    $region5: #{tpu_custom_call.1} parent=1 // loop_body
      %s23 = ssub.s32 %s18, 1
      %s24 = ssub.s32 %s18, 2
      %s31 = sadd.s32 1, %s26
      %p32 = scmp.ge.s32.totalorder %s31, 1
      %s33 = scalar_select %p32, 0, %s31
      %s34 = sadd.s32 1, %s25
      %s35 = scalar_select %p32, %s34, %s25
      %p36 = scmp.ge.s32.totalorder %s35, 2
      %s37 = scalar_select %p36, 0, %s35
      %s38 = ssub.s32 %s25, %s37
      %s39 = ssub.s32 %s26, %s33
      %s40 = sor.u32 %s38, %s39
      %p41 = scmp.eq.s32.totalorder %s40, 0
      %s43 = sadd.s32 %s42, 1
      %s44 = scalar_select %p41, %s42, %s43
      %p47 = pneg %p41
      %p48 = scmp.eq.s32.totalorder %s18, 1
      %p49 = por %p47, %p48
      %p50 = scmp.ne.s32.totalorder %s42, %s45
      %p51 = scmp.eq.s32.totalorder %s18, 0
      %p52 = por %p50, %p51
      %p53 = scmp.ne.s32.totalorder %s42, %s45
      %p54 = scmp.eq.s32.totalorder %s23, 1
      %p55 = por %p53, %p54
      %p56 = scmp.ne.s32.totalorder %s45, %s46
      %p57 = scmp.eq.s32.totalorder %s23, 0
      %p58 = por %p56, %p57
      %p59 = scmp.ne.s32.totalorder %s45, %s46
      %p60 = scmp.eq.s32.totalorder %s24, 1
      %p61 = por %p59, %p60
      %p63 = scmp.ne.s32.totalorder %s46, %s62
      %p64 = scmp.eq.s32.totalorder %s24, 0
      %p65 = por %p63, %p64
      %s66 = ssub.s32 %s25, %s37
      %p67 = scmp.eq.s32.totalorder %s66, 0
      %s69 = sadd.s32 %s68, 1
      %s70 = scalar_select %p67, %s68, %s69
      %p73 = pneg %p67
      %p74 = scmp.eq.s32.totalorder %s18, 1
      %p75 = por %p73, %p74
      %p76 = scmp.ne.s32.totalorder %s68, %s71
      %p77 = scmp.eq.s32.totalorder %s18, 0
      %p78 = por %p76, %p77
      %p79 = scmp.ne.s32.totalorder %s68, %s71
      %p80 = scmp.eq.s32.totalorder %s23, 1
      %p81 = por %p79, %p80
      %p82 = scmp.ne.s32.totalorder %s71, %s72
      %p83 = scmp.eq.s32.totalorder %s23, 0
      %p84 = por %p82, %p83
      %p85 = scmp.ne.s32.totalorder %s71, %s72
      %p86 = scmp.eq.s32.totalorder %s24, 1
      %p87 = por %p85, %p86
      %p89 = scmp.ne.s32.totalorder %s72, %s88
      %p90 = scmp.eq.s32.totalorder %s24, 0
      %p91 = por %p89, %p90
      %s92 = ssub.s32 %s25, %s37
      %s93 = ssub.s32 %s26, %s33
      %s94 = sor.u32 %s92, %s93
      %p95 = scmp.eq.s32.totalorder %s94, 0
      %s97 = sadd.s32 %s96, 1
      %s98 = scalar_select %p95, %s96, %s97
      %p101 = pneg %p95
      %p102 = scmp.eq.s32.totalorder %s18, 1
      %p103 = por %p101, %p102
      %p104 = scmp.ne.s32.totalorder %s96, %s99
      %p105 = scmp.eq.s32.totalorder %s18, 0
      %p106 = por %p104, %p105
      %p107 = scmp.ne.s32.totalorder %s96, %s99
      %p108 = scmp.eq.s32.totalorder %s23, 1
      %p109 = por %p107, %p108
      %p110 = scmp.ne.s32.totalorder %s99, %s100
      %p111 = scmp.eq.s32.totalorder %s23, 0
      %p112 = por %p110, %p111
      %p113 = scmp.ne.s32.totalorder %s99, %s100
      %p114 = scmp.eq.s32.totalorder %s24, 1
      %p115 = por %p113, %p114
      %p117 = scmp.ne.s32.totalorder %s100, %s116
      %p118 = scmp.eq.s32.totalorder %s24, 0
      %p119 = por %p117, %p118
      %p120 = scmp.le.s32.totalorder 1, %s18
      %p121 = scmp.lt.s32.totalorder %s18, 3
      %p122 = pnand %p120, %p121
      %p123 = pneg %p122
      // Predicated region
      $region9: #{tpu_custom_call.1} parent=5 // pred_check
        _
      $region10: #{tpu_custom_call.1} parent=5 // pred_check_branch
        %125 = sbr.rel (%p122) target = $region12
      $region11: #{tpu_custom_call.1} parent=5 // pred_region
        %s126 = ssub.s32 %s18, 1
      $region12: #{tpu_custom_call.1} parent=5 // pred_fallthru
        _
      %p127 = scmp.lt.s32.totalorder %s18, 2
      // Predicated region
      $region13: #{tpu_custom_call.1} parent=5 // pred_check
        %p128 = pneg %p127
      $region14: #{tpu_custom_call.1} parent=5 // pred_check_branch
        %130 = sbr.rel (%p128) target = $region16
      $region15: #{tpu_custom_call.1} parent=5 // pred_region
        // Predicated region
        $region17: #{tpu_custom_call.1} parent=15 // pred_check
          %p131 = pneg %p52
        $region18: #{tpu_custom_call.1} parent=15 // pred_check_branch
          %133 = sbr.rel (%p131) target = $region20
        $region19: #{tpu_custom_call.1} parent=15 // pred_region
          %s134 = sand.u32 %s42, 1
          %s135 = scalar_lea.sflag [#allocation3], %s134
          %s136 = sand.u32 %s42, 1
          %s137 = smul.addr %s136, 64
          %s138 = scalar_lea.vmem [#allocation2], %s137
          %s140 = ssub.s32 1024, 1024
          %141 = vsyncadd %s135, %s140
          %s142 = smul.addr %s25, 8
          %s143 = sadd.s32 %s26, %s142
          %s144 = smul.addr %s143, 128
          %s145 = scalar_lea.hbm %s0, %s144
          %s146 = sshll.u32 %s138, 4
          %s147 = int_to_ptr.vmem [resolvable:$true] %s146
          %152 = dma.hbm_to_vmem [thread:$0]  %s145, 1024, %s147, %s135, 128, 128, 8
        $region20: #{tpu_custom_call.1} parent=15 // pred_fallthru
          _
      $region16: #{tpu_custom_call.1} parent=5 // pred_fallthru
        _
      %p153 = scmp.le.s32.totalorder 1, %s18
      %p154 = scmp.lt.s32.totalorder %s18, 3
      %p155 = pnand %p153, %p154
      %p156 = pneg %p155
      // Predicated region
      $region21: #{tpu_custom_call.1} parent=5 // pred_check
        _
      $region22: #{tpu_custom_call.1} parent=5 // pred_check_branch
        %158 = sbr.rel (%p155) target = $region24
      $region23: #{tpu_custom_call.1} parent=5 // pred_region
        %s159 = ssub.s32 %s18, 1
        %s160 = sand.u32 %s45, 1
        %s161 = scalar_lea.sflag [#allocation3], %s160
        %s162 = sand.u32 %s45, 1
        %s163 = smul.addr %s162, 64
        %s164 = scalar_lea.vmem [#allocation2], %s163
        // Predicated region
        $region25: #{tpu_custom_call.1} parent=23 // pred_check
          %p165 = pneg %p58
        $region26: #{tpu_custom_call.1} parent=23 // pred_check_branch
          %167 = sbr.rel (%p165) target = $region28
        $region27: #{tpu_custom_call.1} parent=23 // pred_region
          %168 = dma.done %s161, 1024
        $region28: #{tpu_custom_call.1} parent=23 // pred_fallthru
          _
        %s169 = sand.u32 %s45, 1
        %s170 = scalar_lea.sflag [#allocation3], %s169
        %s171 = sand.u32 %s45, 1
        %s172 = smul.addr %s171, 64
        %s173 = scalar_lea.vmem [#allocation2], %s172
        %p174 = pneg %p58
        %p175 = pneg %p55
        %p176 = pneg %p84
        %p177 = pneg %p81
        %s178 = sand.u32 %s71, 1
        %s179 = scalar_lea.sflag [#allocation4], %s178
        %s180 = sand.u32 %s71, 1
        %s181 = smul.addr %s180, 8
        %s182 = scalar_lea.vmem [#allocation5], %s181
        %p183 = pneg %p112
        %p184 = pneg %p109
        %s185 = sand.u32 %s99, 1
        %s186 = scalar_lea.sflag [#allocation7], %s185
        %s187 = sand.u32 %s99, 1
        %s188 = smul.addr %s187, 8
        %s189 = scalar_lea.vmem [#allocation6], %s188
        %v190 = vld [vmem:[%s164] sm:$0xff]
        %v191 = vld [vmem:[%s164 + $0x8] sm:$0xff]
        %v192 = vld [vmem:[%s164 + $0x10] sm:$0xff]
        %v193 = vld [vmem:[%s164 + $0x18] sm:$0xff]
        %v194 = vld [vmem:[%s164 + $0x20] sm:$0xff]
        %v195 = vld [vmem:[%s164 + $0x28] sm:$0xff]
        %v196 = vld [vmem:[%s164 + $0x30] sm:$0xff]
        %v197 = vld [vmem:[%s164 + $0x38] sm:$0xff]
        %vm198 = vcmask 261120
        %v199 = vsel %vm198, %v190, -inf
        %v200 = vsel %vm198, %v191, -inf
        %v201 = vsel %vm198, %v192, -inf
        %v202 = vsel %vm198, %v193, -inf
        %v203 = vsel %vm198, %v194, -inf
        %v204 = vmax.f32 %v199, %v203
        %v205 = vsel %vm198, %v195, -inf
        %v206 = vmax.f32 %v200, %v205
        %v207 = vsel %vm198, %v196, -inf
        %v208 = vmax.f32 %v201, %v207
        %v209 = vsel %vm198, %v197, -inf
        %v210 = vmax.f32 %v202, %v209
        %v211 = vmax.f32 %v204, %v206
        %v212 = vmax.f32 %v208, %v210
        %v213 = vmax.f32 %v211, %v212
        %214 = vst.msk [vmem:[%s189] sm:$0xff] %vm198, %v213
        %v215 = vrot.slane %v199, 4
        %v216 = vmax.f32 %v199, %v215
        %v217 = vrot.slane %v216, 2
        %v218 = vmax.f32 %v216, %v217
        %v219 = vrot.slane %v218, 1
        %v220 = vmax.f32 %v218, %v219
        %v221 = vrot.slane %v200, 4
        %v222 = vmax.f32 %v200, %v221
        %v223 = vrot.slane %v222, 2
        %v224 = vmax.f32 %v222, %v223
        %v225 = vrot.slane %v224, 1
        %v226 = vmax.f32 %v224, %v225
        %v227 = vrot.slane %v201, 4
        %v228 = vmax.f32 %v201, %v227
        %v229 = vrot.slane %v228, 2
        %v230 = vmax.f32 %v228, %v229
        %v231 = vrot.slane %v230, 1
        %v232 = vmax.f32 %v230, %v231
        %v233 = vrot.slane %v202, 4
        %v234 = vmax.f32 %v202, %v233
        %v235 = vrot.slane %v234, 2
        %v236 = vmax.f32 %v234, %v235
        %v237 = vrot.slane %v236, 1
        %v238 = vmax.f32 %v236, %v237
        %v239 = vrot.slane %v203, 4
        %v240 = vmax.f32 %v203, %v239
        %v241 = vrot.slane %v240, 2
        %v242 = vmax.f32 %v240, %v241
        %v243 = vrot.slane %v242, 1
        %v244 = vmax.f32 %v242, %v243
        %v245 = vrot.slane %v205, 4
        %v246 = vmax.f32 %v205, %v245
        %v247 = vrot.slane %v246, 2
        %v248 = vmax.f32 %v246, %v247
        %v249 = vrot.slane %v248, 1
        %v250 = vmax.f32 %v248, %v249
        %v251 = vrot.slane %v207, 4
        %v252 = vmax.f32 %v207, %v251
        %v253 = vrot.slane %v252, 2
        %v254 = vmax.f32 %v252, %v253
        %v255 = vrot.slane %v254, 1
        %v256 = vmax.f32 %v254, %v255
        %v257 = vrot.slane %v209, 4
        %v258 = vmax.f32 %v209, %v257
        %v259 = vrot.slane %v258, 2
        %v260 = vmax.f32 %v258, %v259
        %v261 = vrot.slane %v260, 1
        %v262 = vmax.f32 %v260, %v261
        %p263 = scmp.eq.s32.totalorder %s28, 0
        // Predicated region
        $region29: #{tpu_custom_call.1} parent=23 // pred_check
          %p264 = pneg %p263
        $region30: #{tpu_custom_call.1} parent=23 // pred_check_branch
          %266 = sbr.rel (%p264) target = $region32
        $region31: #{tpu_custom_call.1} parent=23 // pred_region
          %vm275 = vcmask 1041409
          %v276 = vsel %vm275, %v226, %v220
          %vm277 = vcmask 1042434
          %v278 = vsel %vm277, %v232, %v276
          %vm279 = vcmask 1043459
          %v280 = vsel %vm279, %v238, %v278
          %vm281 = vcmask 1044484
          %v282 = vsel %vm281, %v244, %v280
          %vm283 = vcmask 1045509
          %v284 = vsel %vm283, %v250, %v282
          %vm285 = vcmask 1046534
          %v286 = vsel %vm285, %v256, %v284
          %vm287 = vcmask 1047559
          %v288 = vsel %vm287, %v262, %v286
          %290 = vst.msk [vmem:[%s182] sm:$0xff] %vm198, %v288
        $region32: #{tpu_custom_call.1} parent=23 // pred_fallthru
          _
        %p291 = scmp.ne.s32.totalorder %s28, 0
        // Predicated region
        $region33: #{tpu_custom_call.1} parent=23 // pred_check
          %p292 = pneg %p291
        $region34: #{tpu_custom_call.1} parent=23 // pred_check_branch
          %294 = sbr.rel (%p292) target = $region36
        $region35: #{tpu_custom_call.1} parent=23 // pred_region
          %v295 = vld [vmem:[%s182] sm:$0xff]
          %vm304 = vcmask 1041409
          %v305 = vsel %vm304, %v226, %v220
          %vm306 = vcmask 1042434
          %v307 = vsel %vm306, %v232, %v305
          %vm308 = vcmask 1043459
          %v309 = vsel %vm308, %v238, %v307
          %vm310 = vcmask 1044484
          %v311 = vsel %vm310, %v244, %v309
          %vm312 = vcmask 1045509
          %v313 = vsel %vm312, %v250, %v311
          %vm314 = vcmask 1046534
          %v315 = vsel %vm314, %v256, %v313
          %vm316 = vcmask 1047559
          %v317 = vsel %vm316, %v262, %v315
          %v319 = vmax.f32 %v295, %v317
          %320 = vst.msk [vmem:[%s182] sm:$0xff] %vm198, %v319
        $region36: #{tpu_custom_call.1} parent=23 // pred_fallthru
          _
        %s321 = sand.u32 %s71, 1
        %s322 = scalar_lea.sflag [#allocation4], %s321
        %s323 = sand.u32 %s71, 1
        %s324 = smul.addr %s323, 8
        %s325 = scalar_lea.vmem [#allocation5], %s324
        %s326 = sand.u32 %s99, 1
        %s327 = scalar_lea.sflag [#allocation7], %s326
        %s328 = sand.u32 %s99, 1
        %s329 = smul.addr %s328, 8
        %s330 = scalar_lea.vmem [#allocation6], %s329
        // Predicated region
        $region37: #{tpu_custom_call.1} parent=23 // pred_check
          %p331 = pneg %p81
        $region38: #{tpu_custom_call.1} parent=23 // pred_check_branch
          %333 = sbr.rel (%p331) target = $region40
        $region39: #{tpu_custom_call.1} parent=23 // pred_region
          %s335 = ssub.s32 128, 128
          %336 = vsyncadd %s322, %s335
          %s337 = smul.addr %s27, 128
          %s338 = scalar_lea.hbm %s1, %s337
          %s340 = sshll.u32 %s325, 4
          %s341 = int_to_ptr.vmem [resolvable:$true] %s340
          %343 = dma.vmem_to_hbm [thread:$0]  %s341, 128, %s338, %s322
        $region40: #{tpu_custom_call.1} parent=23 // pred_fallthru
          _
        // Predicated region
        $region41: #{tpu_custom_call.1} parent=23 // pred_check
          %p344 = pneg %p109
        $region42: #{tpu_custom_call.1} parent=23 // pred_check_branch
          %346 = sbr.rel (%p344) target = $region44
        $region43: #{tpu_custom_call.1} parent=23 // pred_region
          %s348 = ssub.s32 128, 128
          %349 = vsyncadd %s327, %s348
          %s350 = sadd.s32 %s28, %s27
          %s351 = smul.addr %s350, 128
          %s352 = scalar_lea.hbm %s2, %s351
          %s354 = sshll.u32 %s330, 4
          %s355 = int_to_ptr.vmem [resolvable:$true] %s354
          %357 = dma.vmem_to_hbm [thread:$0]  %s355, 128, %s352, %s327
        $region44: #{tpu_custom_call.1} parent=23 // pred_fallthru
          _
      $region24: #{tpu_custom_call.1} parent=5 // pred_fallthru
        _
      %p358 = scmp.le.s32.totalorder 2, %s18
      // Predicated region
      $region45: #{tpu_custom_call.1} parent=5 // pred_check
        %p359 = pneg %p358
      $region46: #{tpu_custom_call.1} parent=5 // pred_check_branch
        %361 = sbr.rel (%p359) target = $region48
      $region47: #{tpu_custom_call.1} parent=5 // pred_region
        %s362 = ssub.s32 %s18, 2
        // Predicated region
        $region49: #{tpu_custom_call.1} parent=47 // pred_check
          %p363 = pneg %p87
        $region50: #{tpu_custom_call.1} parent=47 // pred_check_branch
          %365 = sbr.rel (%p363) target = $region52
        $region51: #{tpu_custom_call.1} parent=47 // pred_region
          %s366 = sand.u32 %s72, 1
          %s367 = scalar_lea.sflag [#allocation4], %s366
          %s368 = sand.u32 %s72, 1
          %s369 = smul.addr %s368, 8
          %s370 = scalar_lea.vmem [#allocation5], %s369
          %371 = dma.done %s367, 128
        $region52: #{tpu_custom_call.1} parent=47 // pred_fallthru
          _
        // Predicated region
        $region53: #{tpu_custom_call.1} parent=47 // pred_check
          %p372 = pneg %p115
        $region54: #{tpu_custom_call.1} parent=47 // pred_check_branch
          %374 = sbr.rel (%p372) target = $region56
        $region55: #{tpu_custom_call.1} parent=47 // pred_region
          %s375 = sand.u32 %s100, 1
          %s376 = scalar_lea.sflag [#allocation7], %s375
          %s377 = sand.u32 %s100, 1
          %s378 = smul.addr %s377, 8
          %s379 = scalar_lea.vmem [#allocation6], %s378
          %380 = dma.done %s376, 128
        $region56: #{tpu_custom_call.1} parent=47 // pred_fallthru
          _
      $region48: #{tpu_custom_call.1} parent=5 // pred_fallthru
        _
    $region6: #{tpu_custom_call.1} parent=1 // loop_footer
      %s22 = sadd.s32 1, %s18
    $region7: #{tpu_custom_call.1} parent=1 // loop_footer_branch
      %17 = sbr.rel target = $region3
    $region8: #{tpu_custom_call.1} parent=1 // loop_exit
      _
    %381 = vsyncpa [#allocation3], 1
    %s382 = scalar_lea.sflag [#allocation3], 1
    %383 = vsyncpa %s382, 1
    %384 = vsyncpa [#allocation4], 1
    %s385 = scalar_lea.sflag [#allocation4], 1
    %386 = vsyncpa %s385, 1
    %387 = vsyncpa [#allocation7], 1
    %s388 = scalar_lea.sflag [#allocation7], 1
    %389 = vsyncpa %s388, 1

</llo_original>
